<compile_context>
chip_gen: v7x
topology: tpu7x:2x2x1
jax: 0.10.0
libtpu: 0.0.40
codegen_flags: <defaults>
</compile_context>

<pallas_src>
import functools

import jax
import jax.numpy as jnp
from jax.experimental import pallas as pl
from jax.experimental.pallas import tpu as pltpu


def _round_up(x, m):
    return ((x + m - 1) // m) * m


def _cdiv(a, b):
    return (a + b - 1) // b


def dueling_q_kernel(xt_ref, mask_ref, w1t_ref, w2t_ref, wqt_ref, b_ref, q_ref,
                     *, H, A):
    """Feature-major dueling-Q tile.

    xt_ref   : (F, TN)   transposed input features (agents on lanes)
    mask_ref : (1, TN)   RL_indice mask
    w1t_ref  : (H, F)    policy_1 weights (transposed, VMEM-resident)
    w2t_ref  : (H, H)    policy_2 weights (transposed, VMEM-resident)
    wqt_ref  : (A, H)    fused dueling-head weights (transposed, VMEM-resident)
    b_ref    : (max(H,A), 3)  packed biases [b1 | b2 | bq] as columns (f32)
    q_ref    : (A, TN)   masked Q output (f32)
    """
    # policy_1 + ReLU    (bias add / relu in f32 on the VPU)
    h1 = jnp.dot(w1t_ref[...], xt_ref[...], preferred_element_type=jnp.float32)
    h1 = jnp.maximum(h1 + b_ref[:H, 0:1], 0.0)
    # policy_2 + ReLU
    h2 = jnp.dot(w2t_ref[...], h1.astype(w2t_ref.dtype),
                 preferred_element_type=jnp.float32)
    h2 = jnp.maximum(h2 + b_ref[:H, 1:2], 0.0)
    # fused dueling head: value + advantage - mean(advantage) folded into Wq/bq
    q = jnp.dot(wqt_ref[...], h2.astype(wqt_ref.dtype),
                preferred_element_type=jnp.float32)
    q = q + b_ref[:A, 2:3]
    # mask controlled vehicles; lane-dense (A, TN) store, no byte inflation
    q_ref[...] = q * mask_ref[...]


def prepare_params(params, compute_dtype=jnp.float32):
    """One-time (per parameter update) preprocessing — keep off the forward hot path.

    params: dict with w1[F,H], b1[1,H], w2[H,H], b2[1,H], wv[H,1], bv[1,1],
            wa[H,A], ba[1,A] (weights stored [in, out], transpose of PyTorch).
    """
    w1, b1 = params["w1"], params["b1"]
    w2, b2 = params["w2"], params["b2"]
    wv, bv = params["wv"], params["bv"]
    wa, ba = params["wa"], params["ba"]
    F, H = w1.shape
    A = wa.shape[1]

    # exact dueling-head fold: V + A - mean(A) == h2 @ Wq + bq
    wq = wa - jnp.mean(wa, axis=1, keepdims=True) + wv          # [H, A]
    bq = ba - jnp.mean(ba, axis=1, keepdims=True) + bv          # [1, A]

    # pack biases into one small VMEM-resident buffer (columns: b1 | b2 | bq)
    HB = max(H, A)
    b_pack = jnp.zeros((HB, 3), jnp.float32)
    b_pack = b_pack.at[:H, 0].set(b1[0].astype(jnp.float32))
    b_pack = b_pack.at[:H, 1].set(b2[0].astype(jnp.float32))
    b_pack = b_pack.at[:A, 2].set(bq[0].astype(jnp.float32))

    return dict(
        w1t=jnp.asarray(w1.T, compute_dtype),    # [H, F]
        w2t=jnp.asarray(w2.T, compute_dtype),    # [H, H]
        wqt=jnp.asarray(wq.T, compute_dtype),    # [A, H]
        b_pack=b_pack,                           # biases stay f32 (post-accum add)
        F=int(F), H=int(H), A=int(A),
        compute_dtype=compute_dtype,
    )


def nongraph_model_forward(x_in, rl_indice, prepared, *, tile_n=8192):
    """x_in: [N, F], rl_indice: [N]; prepared: output of prepare_params()."""
    x_in = jnp.asarray(x_in)
    N, F = x_in.shape
    H, A = prepared["H"], prepared["A"]
    assert F == prepared["F"]
    cdt = prepared["compute_dtype"]

    # ---- tile the agent axis along lanes (multiples of 128) ----
    Npad128 = _round_up(N, 128)
    tile_cap = _round_up(max(int(tile_n), 128), 128)
    # split into >=2 grid steps when there is enough work (v7x has 2 TensorCores)
    min_tiles = 2 if Npad128 >= 256 else 1
    num_tiles = max(min_tiles, _cdiv(Npad128, tile_cap))
    TN = _round_up(_cdiv(Npad128, num_tiles), 128)
    Npad = TN * num_tiles

    # single fused wrapper pass: transpose (+ cast) + pad of X; mask is tiny
    xt = jnp.pad(x_in.T.astype(cdt), ((0, 0), (0, Npad - N)))          # (F, Npad)
    maskt = jnp.pad(rl_indice.astype(jnp.float32).reshape(1, N),
                    ((0, 0), (0, Npad - N)))                           # (1, Npad)

    kernel = functools.partial(dueling_q_kernel, H=H, A=A)

    qT = pl.pallas_call(
        kernel,
        out_shape=jax.ShapeDtypeStruct((A, Npad), jnp.float32),
        grid_spec=pltpu.PrefetchScalarGridSpec(
            num_scalar_prefetch=0,
            grid=(num_tiles,),
            in_specs=[
                pl.BlockSpec((F, TN), lambda i: (0, i)),        # X^T tile (pipelined)
                pl.BlockSpec((1, TN), lambda i: (0, i)),        # mask tile
                pl.BlockSpec((H, F), lambda i: (0, 0)),         # W1^T (VMEM-resident)
                pl.BlockSpec((H, H), lambda i: (0, 0)),         # W2^T (VMEM-resident)
                pl.BlockSpec((A, H), lambda i: (0, 0)),         # fused head Wq^T
                pl.BlockSpec((max(H, A), 3), lambda i: (0, 0)), # packed biases
            ],
            out_specs=pl.BlockSpec((A, TN), lambda i: (0, i)),  # Q^T tile (lane-dense)
        ),
        compiler_params=pltpu.CompilerParams(
            dimension_semantics=("parallel",),
        ),
    )(xt, maskt, prepared["w1t"], prepared["w2t"], prepared["wqt"],
      prepared["b_pack"])

    # tiny epilogue: (A, N) -> (N, A)
    return qT[:, :N].T


def init_params(key, F, H, A):
    """Deterministic init mimicking torch.nn.Linear default (uniform +/- 1/sqrt(fan_in)).
    Weights stored as [in, out] (transpose of PyTorch's [out, in])."""
    def linear(k, fan_in, fan_out):
        kw, kb = jax.random.split(k)
        bound = 1.0 / jnp.sqrt(fan_in)
        w = jax.random.uniform(kw, (fan_in, fan_out), jnp.float32, -bound, bound)
        b = jax.random.uniform(kb, (1, fan_out), jnp.float32, -bound, bound)
        return w, b

    k1, k2, k3, k4 = jax.random.split(key, 4)
    w1, b1 = linear(k1, F, H)
    w2, b2 = linear(k2, H, H)
    wv, bv = linear(k3, H, 1)
    wa, ba = linear(k4, H, A)
    return dict(w1=w1, b1=b1, w2=w2, b2=b2, wv=wv, bv=bv, wa=wa, ba=ba)


def reference_forward(x_in, rl_indice, p):
    """Un-fused reference matching the PyTorch module exactly."""
    h1 = jnp.maximum(x_in @ p["w1"] + p["b1"], 0.0)
    h2 = jnp.maximum(h1 @ p["w2"] + p["b2"], 0.0)
    v = h2 @ p["wv"] + p["bv"]
    a = h2 @ p["wa"] + p["ba"]
    q = v + a - jnp.mean(a, axis=1, keepdims=True)
    return q * rl_indice.reshape(-1, 1)


if __name__ == "__main__":
    N, F, H, A = 8, 8, 32, 4   # num_agents, feature length, hidden, num actions

    key = jax.random.PRNGKey(0)
    k_params, k_x, k_mask = jax.random.split(key, 3)

    params = init_params(k_params, F, H, A)
    x_in = jax.random.normal(k_x, (N, F), jnp.float32)
    rl_indice = (jax.random.uniform(k_mask, (N,)) > 0.5).astype(jnp.float32)

    q_ref = reference_forward(x_in, rl_indice, params)

    # --- parameter prep is done ONCE, off the forward hot path ---
    prep_f32 = prepare_params(params, compute_dtype=jnp.float32)

    # --- f32 path (exact check) ---
    q_state = nongraph_model_forward(x_in, rl_indice, prep_f32)
    q_state = jax.block_until_ready(q_state)
    assert q_state.shape == (N, A)
    assert jnp.allclose(q_state, q_ref, atol=1e-4, rtol=1e-4)

    # --- multi-tile grid path (exercises >=2 grid steps + agent padding) ---
    N2 = 300
    k_x2, k_m2 = jax.random.split(jax.random.PRNGKey(1))
    x2 = jax.random.normal(k_x2, (N2, F), jnp.float32)
    m2 = (jax.random.uniform(k_m2, (N2,)) > 0.5).astype(jnp.float32)
    q2 = jax.block_until_ready(
        nongraph_model_forward(x2, m2, prep_f32, tile_n=128))
    q2_ref = reference_forward(x2, m2, params)
    assert q2.shape == (N2, A)
    assert jnp.allclose(q2, q2_ref, atol=1e-4, rtol=1e-4)

    # --- bf16 MXU-feed path (v6e/v7x memory-traffic optimization), f32 accum ---
    prep_bf16 = prepare_params(params, compute_dtype=jnp.bfloat16)
    q_bf16 = jax.block_until_ready(
        nongraph_model_forward(x_in, rl_indice, prep_bf16))
    assert q_bf16.shape == (N, A)
    assert float(jnp.max(jnp.abs(q_bf16 - q_ref))) < 0.1

    print("KERNEL_OK")
</pallas_src>

<mosaic_0001>
module attributes {stable_mosaic.version = 11 : i64} {
  func.func @dueling_q_kernel(%arg0: i32, %arg1: memref<8x128xf32, #tpu.memory_space<vmem>>, %arg2: memref<1x128xf32, #tpu.memory_space<vmem>>, %arg3: memref<32x8xf32, #tpu.memory_space<vmem>>, %arg4: memref<32x32xf32, #tpu.memory_space<vmem>>, %arg5: memref<4x32xf32, #tpu.memory_space<vmem>>, %arg6: memref<32x3xf32, #tpu.memory_space<vmem>>, %arg7: memref<4x128xf32, #tpu.memory_space<vmem>>) attributes {dimension_semantics = [#tpu.dimension_semantics<parallel>], iteration_bounds = array<i64: 1>, scalar_prefetch = 0 : i64, scratch_operands = 0 : i64, tpu.core_type = #tpu.core_type<tc>, window_params = [{transform_indices = @transform_0, window_bounds = array<i64: 8, 128>}, {transform_indices = @transform_1, window_bounds = array<i64: 1, 128>}, {pipeline_mode = #tpu.pipeline_mode<synchronous>, transform_indices = @transform_2, window_bounds = array<i64: 32, 8>}, {pipeline_mode = #tpu.pipeline_mode<synchronous>, transform_indices = @transform_3, window_bounds = array<i64: 32, 32>}, {pipeline_mode = #tpu.pipeline_mode<synchronous>, transform_indices = @transform_4, window_bounds = array<i64: 4, 32>}, {pipeline_mode = #tpu.pipeline_mode<synchronous>, transform_indices = @transform_5, window_bounds = array<i64: 32, 3>}, {transform_indices = @transform_6, window_bounds = array<i64: 4, 128>}]} {
    %c0 = arith.constant 0 : index
    %c0_0 = arith.constant 0 : index
    %0 = vector.load %arg3[%c0, %c0_0] : memref<32x8xf32, #tpu.memory_space<vmem>>, vector<32x8xf32>
    %c0_1 = arith.constant 0 : index
    %c0_2 = arith.constant 0 : index
    %1 = vector.load %arg1[%c0_1, %c0_2] : memref<8x128xf32, #tpu.memory_space<vmem>>, vector<8x128xf32>
    %cst = arith.constant dense<0.000000e+00> : vector<32x128xf32>
    %2 = tpu.matmul %0, %1, %cst {dimension_numbers = #tpu.dot_dimension_numbers<[1], [0], [0], [1], [0, 0, 1, 1], [], []>} : vector<32x8xf32>, vector<8x128xf32>, vector<32x128xf32> -> vector<32x128xf32>
    %c0_3 = arith.constant 0 : index
    %c0_4 = arith.constant 0 : index
    %3 = vector.load %arg6[%c0_3, %c0_4] : memref<32x3xf32, #tpu.memory_space<vmem>>, vector<32x1xf32>
    %4 = vector.broadcast %3 : vector<32x1xf32> to vector<32x128xf32>
    %5 = arith.addf %2, %4 : vector<32x128xf32>
    %cst_5 = arith.constant 0.000000e+00 : f32
    %6 = vector.broadcast %cst_5 : f32 to vector<32x128xf32>
    %7 = arith.maximumf %5, %6 : vector<32x128xf32>
    %c0_6 = arith.constant 0 : index
    %c0_7 = arith.constant 0 : index
    %8 = vector.load %arg4[%c0_6, %c0_7] : memref<32x32xf32, #tpu.memory_space<vmem>>, vector<32x32xf32>
    %cst_8 = arith.constant dense<0.000000e+00> : vector<32x128xf32>
    %9 = tpu.matmul %8, %7, %cst_8 {dimension_numbers = #tpu.dot_dimension_numbers<[1], [0], [0], [1], [0, 0, 1, 1], [], []>} : vector<32x32xf32>, vector<32x128xf32>, vector<32x128xf32> -> vector<32x128xf32>
    %c0_9 = arith.constant 0 : index
    %c1 = arith.constant 1 : index
    %10 = vector.load %arg6[%c0_9, %c1] : memref<32x3xf32, #tpu.memory_space<vmem>>, vector<32x1xf32>
    %11 = vector.broadcast %10 : vector<32x1xf32> to vector<32x128xf32>
    %12 = arith.addf %9, %11 : vector<32x128xf32>
    %cst_10 = arith.constant 0.000000e+00 : f32
    %13 = vector.broadcast %cst_10 : f32 to vector<32x128xf32>
    %14 = arith.maximumf %12, %13 : vector<32x128xf32>
    %c0_11 = arith.constant 0 : index
    %c0_12 = arith.constant 0 : index
    %15 = vector.load %arg5[%c0_11, %c0_12] : memref<4x32xf32, #tpu.memory_space<vmem>>, vector<4x32xf32>
    %cst_13 = arith.constant dense<0.000000e+00> : vector<4x128xf32>
    %16 = tpu.matmul %15, %14, %cst_13 {dimension_numbers = #tpu.dot_dimension_numbers<[1], [0], [0], [1], [0, 0, 1, 1], [], []>} : vector<4x32xf32>, vector<32x128xf32>, vector<4x128xf32> -> vector<4x128xf32>
    %c0_14 = arith.constant 0 : index
    %c2 = arith.constant 2 : index
    %17 = vector.load %arg6[%c0_14, %c2] : memref<32x3xf32, #tpu.memory_space<vmem>>, vector<4x1xf32>
    %18 = vector.broadcast %17 : vector<4x1xf32> to vector<4x128xf32>
    %19 = arith.addf %16, %18 : vector<4x128xf32>
    %c0_15 = arith.constant 0 : index
    %c0_16 = arith.constant 0 : index
    %20 = vector.load %arg2[%c0_15, %c0_16] : memref<1x128xf32, #tpu.memory_space<vmem>>, vector<1x128xf32>
    %21 = vector.broadcast %20 : vector<1x128xf32> to vector<4x128xf32>
    %22 = arith.mulf %19, %21 : vector<4x128xf32>
    %c0_17 = arith.constant 0 : index
    %c0_18 = arith.constant 0 : index
    %23 = vector.load %arg7[%c0_17, %c0_18] : memref<4x128xf32, #tpu.memory_space<vmem>>, vector<4x128xf32>
    tpu.vector_store %arg7[%c0_17, %c0_18], %22 {strides = array<i32>} : memref<4x128xf32, #tpu.memory_space<vmem>>, vector<4x128xf32>,
    return
  }
  func.func @transform_0(%arg0: i32) -> (i32, i32) {
    %c0_i32 = arith.constant 0 : i32
    %c0_i32_0 = arith.constant 0 : i32
    return %c0_i32, %arg0 : i32, i32
  }
  func.func @transform_1(%arg0: i32) -> (i32, i32) {
    %c0_i32 = arith.constant 0 : i32
    %c0_i32_0 = arith.constant 0 : i32
    return %c0_i32, %arg0 : i32, i32
  }
  func.func @transform_2(%arg0: i32) -> (i32, i32) {
    %c0_i32 = arith.constant 0 : i32
    %c0_i32_0 = arith.constant 0 : i32
    %c0_i32_1 = arith.constant 0 : i32
    return %c0_i32, %c0_i32_0 : i32, i32
  }
  func.func @transform_3(%arg0: i32) -> (i32, i32) {
    %c0_i32 = arith.constant 0 : i32
    %c0_i32_0 = arith.constant 0 : i32
    %c0_i32_1 = arith.constant 0 : i32
    return %c0_i32, %c0_i32_0 : i32, i32
  }
  func.func @transform_4(%arg0: i32) -> (i32, i32) {
    %c0_i32 = arith.constant 0 : i32
    %c0_i32_0 = arith.constant 0 : i32
    %c0_i32_1 = arith.constant 0 : i32
    return %c0_i32, %c0_i32_0 : i32, i32
  }
  func.func @transform_5(%arg0: i32) -> (i32, i32) {
    %c0_i32 = arith.constant 0 : i32
    %c0_i32_0 = arith.constant 0 : i32
    %c0_i32_1 = arith.constant 0 : i32
    return %c0_i32, %c0_i32_0 : i32, i32
  }
  func.func @transform_6(%arg0: i32) -> (i32, i32) {
    %c0_i32 = arith.constant 0 : i32
    %c0_i32_0 = arith.constant 0 : i32
    return %c0_i32, %arg0 : i32, i32
  }
}

</mosaic_0001>

<llo_original>
// kernel: tpu_custom_call.1
$region0: #{tpu_custom_call.1}
  #allocation0 [shape = 'u32[]', space=smem, size = 0x4, offset = 0x4, fixed_abs, tag = 'smem constant byte address 0x4 - core index']
  #allocation1 [shape = 'u32[144,128]{1,0:T(1,128)}', space=vmem, size = 0x12000, scoped, tag = 'internal scratch']
  %s0 = inlined_call_operand.vmem [shape: f32[8,128], index: 0, kind: input, shape index: {}]
  %s1 = inlined_call_operand.vmem [shape: f32[1,128], index: 1, kind: input, shape index: {}]
  %s2 = inlined_call_operand.vmem [shape: f32[32,8], index: 2, kind: input, shape index: {}]
  %s3 = inlined_call_operand.vmem [shape: f32[32,32], index: 3, kind: input, shape index: {}]
  %s4 = inlined_call_operand.vmem [shape: f32[4,32], index: 4, kind: input, shape index: {}]
  %s5 = inlined_call_operand.vmem [shape: f32[32,3], index: 5, kind: input, shape index: {}]
  %s6 = inlined_call_operand.hbm [shape: f32[4,128], index: 6, kind: output, shape index: {}]
  %s7 = sld [smem:[#allocation0]]
  $region34: #{tpu_custom_call.1} parent=0
    _
  %s9 = ssub.s32 1, %s7
  %s10 = scalar_select 0, %s9, %s7
  $region1: #{tpu_custom_call.1} parent=0
    #allocation2 [shape = 'u8[2048]{0}', space=vmem, size = 0x800, scoped, tag = 'output window, operand 0, single buffered']
    #allocation3 [shape = 's32[1]{0}', space=sflag, size = 0x4, scoped, tag = 'scoped memory for tpu_custom_call.1']
    %11 = vsyncpa [#allocation3], 0
    // Predicated region
    $region2: #{tpu_custom_call.1} parent=1 // pred_check
      _
    $region3: #{tpu_custom_call.1} parent=1 // pred_check_branch
      %13 = sbr.rel (0) target = $region5
    $region4: #{tpu_custom_call.1} parent=1 // pred_region
      _
    $region5: #{tpu_custom_call.1} parent=1 // pred_fallthru
      _
    // Predicated region
    $region6: #{tpu_custom_call.1} parent=1 // pred_check
      _
    $region7: #{tpu_custom_call.1} parent=1 // pred_check_branch
      %15 = sbr.rel (0) target = $region9
    $region8: #{tpu_custom_call.1} parent=1 // pred_region
      _
    $region9: #{tpu_custom_call.1} parent=1 // pred_fallthru
      _
    // Predicated region
    $region10: #{tpu_custom_call.1} parent=1 // pred_check
      _
    $region11: #{tpu_custom_call.1} parent=1 // pred_check_branch
      %17 = sbr.rel (0) target = $region13
    $region12: #{tpu_custom_call.1} parent=1 // pred_region
      _
    $region13: #{tpu_custom_call.1} parent=1 // pred_fallthru
      _
    // Predicated region
    $region14: #{tpu_custom_call.1} parent=1 // pred_check
      _
    $region15: #{tpu_custom_call.1} parent=1 // pred_check_branch
      %19 = sbr.rel (0) target = $region17
    $region16: #{tpu_custom_call.1} parent=1 // pred_region
      _
    $region17: #{tpu_custom_call.1} parent=1 // pred_fallthru
      _
    // Predicated region
    $region18: #{tpu_custom_call.1} parent=1 // pred_check
      _
    $region19: #{tpu_custom_call.1} parent=1 // pred_check_branch
      %21 = sbr.rel (0) target = $region21
    $region20: #{tpu_custom_call.1} parent=1 // pred_region
      _
    $region21: #{tpu_custom_call.1} parent=1 // pred_fallthru
      _
    // Predicated region
    $region22: #{tpu_custom_call.1} parent=1 // pred_check
      _
    $region23: #{tpu_custom_call.1} parent=1 // pred_check_branch
      %23 = sbr.rel (0) target = $region25
    $region24: #{tpu_custom_call.1} parent=1 // pred_region
      _
    $region25: #{tpu_custom_call.1} parent=1 // pred_fallthru
      _
    %v24 = vld [vmem:[%s2] sm:$0xff]
    %v25 = vld [vmem:[%s2 + $0x8] sm:$0xff]
    %v26 = vld [vmem:[%s2 + $0x10] sm:$0xff]
    %v27 = vld [vmem:[%s2 + $0x18] sm:$0xff]
    %v28 = vld [vmem:[%s0] sm:$0xff]
    %v29 = vld [vmem:[%s5] sm:$0xff]
    %v30 = vld [vmem:[%s5 + $0x8] sm:$0xff]
    %v31 = vld [vmem:[%s5 + $0x10] sm:$0xff]
    %v32 = vld [vmem:[%s5 + $0x18] sm:$0xff]
    %34 = vset.pattern.permute.xlu0 0
    %35 = vperm.xlu0 %34, %v29
    %v36 = vpop.permute.xlu0 %35
    %39 = vset.pattern.permute.xlu0 0
    %40 = vperm.xlu0 %39, %v30
    %v41 = vpop.permute.xlu0 %40
    %44 = vset.pattern.permute.xlu0 0
    %45 = vperm.xlu0 %44, %v31
    %v46 = vpop.permute.xlu0 %45
    %49 = vset.pattern.permute.xlu0 0
    %50 = vperm.xlu0 %49, %v32
    %v51 = vpop.permute.xlu0 %50
    %vm53 = vcmask 64512
    %v55 = vsel %vm53, %v24, 0
    %v58 = vsel %vm53, %v25, 0
    %v61 = vsel %vm53, %v26, 0
    %v64 = vsel %vm53, %v27, 0
    %66 = vmatprep.subr.mxu0 0.0
    %67 = vmatpush1.msra.mxu0 %v28
    %68 = vmatprep.subr.mxu0 0.0
    %69 = vmatpush1.msra.mxu0 0.0
    %70 = vmatprep.subr.mxu0 0.0
    %71 = vmatpush1.msra.mxu0 0.0
    %72 = vmatprep.subr.mxu0 0.0
    %73 = vmatpush1.msra.mxu0 0.0
    %74 = vmatprep.subr.mxu0 0.0
    %75 = vmatpush1.msra.mxu0 0.0
    %76 = vmatprep.subr.mxu0 0.0
    %77 = vmatpush1.msra.mxu0 0.0
    %78 = vmatprep.subr.mxu0 0.0
    %79 = vmatpush1.msra.mxu0 0.0
    %80 = vmatprep.subr.mxu0 0.0
    %81 = vmatpush1.msra.mxu0 0.0
    %82 = vmatprep.subr.mxu0 0.0
    %83 = vmatpush1.msra.mxu0 0.0
    %84 = vmatprep.subr.mxu0 0.0
    %85 = vmatpush1.msra.mxu0 0.0
    %86 = vmatprep.subr.mxu0 0.0
    %87 = vmatpush1.msra.mxu0 0.0
    %88 = vmatprep.subr.mxu0 0.0
    %89 = vmatpush1.msra.mxu0 0.0
    %90 = vmatprep.subr.mxu0 0.0
    %91 = vmatpush1.msra.mxu0 0.0
    %92 = vmatprep.subr.mxu0 0.0
    %93 = vmatpush1.msra.mxu0 0.0
    %94 = vmatprep.subr.mxu0 0.0
    %95 = vmatpush1.msra.mxu0 0.0
    %96 = vmatprep.subr.mxu0 0.0
    %97 = vmatpush1.msra.mxu0 0.0
    %98 = vmatprep.subr.mxu0 0.0
    %99 = vmatpush1.msra.mxu0 0.0
    %100 = vmatprep.subr.mxu0 0.0
    %101 = vmatpush1.msra.mxu0 0.0
    %102 = vmatprep.subr.mxu0 0.0
    %103 = vmatpush1.msra.mxu0 0.0
    %104 = vmatprep.subr.mxu0 0.0
    %105 = vmatpush1.msra.mxu0 0.0
    %106 = vmatprep.subr.mxu0 0.0
    %107 = vmatpush1.msra.mxu0 0.0
    %108 = vmatprep.subr.mxu0 0.0
    %109 = vmatpush1.msra.mxu0 0.0
    %110 = vmatprep.subr.mxu0 0.0
    %111 = vmatpush1.msra.mxu0 0.0
    %112 = vmatprep.subr.mxu0 0.0
    %113 = vmatpush1.msra.mxu0 0.0
    %114 = vmatprep.subr.mxu0 0.0
    %115 = vmatpush1.msra.mxu0 0.0
    %116 = vmatprep.subr.mxu0 0.0
    %117 = vmatpush1.msra.mxu0 0.0
    %118 = vmatprep.subr.mxu0 0.0
    %119 = vmatpush1.msra.mxu0 0.0
    %120 = vmatprep.subr.mxu0 0.0
    %121 = vmatpush1.msra.mxu0 0.0
    %122 = vmatprep.subr.mxu0 0.0
    %123 = vmatpush1.msra.mxu0 0.0
    %124 = vmatprep.subr.mxu0 0.0
    %125 = vmatpush1.msra.mxu0 0.0
    %126 = vmatprep.subr.mxu0 0.0
    %127 = vmatpush1.msra.mxu0 0.0
    %128 = vmatprep.subr.mxu0 0.0
    %129 = vmatpush1.msra.mxu0 0.0
    %130 = vmatprep.mubr.f32.mxu0 0.0
    %131 = vmatmul.mubr.f32.gmra.mrb[0].mxu0 %v55
    %v132 = vpop.f32.mrb[0].mxu0
    %v133 = vadd.f32 %v36, %v132
    %v134 = vpop.f32.mrb[0].mxu0
    %135 = vmatprep.mubr.f32.mxu0 0.0
    %136 = vmatmul.mubr.f32.gmra.mrb[0].mxu0 %v58
    %v137 = vpop.f32.mrb[0].mxu0
    %v138 = vadd.f32 %v41, %v137
    %v139 = vpop.f32.mrb[0].mxu0
    %140 = vmatprep.mubr.f32.mxu0 0.0
    %141 = vmatmul.mubr.f32.gmra.mrb[0].mxu0 %v61
    %v142 = vpop.f32.mrb[0].mxu0
    %v143 = vadd.f32 %v46, %v142
    %v144 = vpop.f32.mrb[0].mxu0
    %145 = vmatprep.mubr.f32.mxu0 0.0
    %146 = vmatmul.mubr.f32.gmra.mrb[0].mxu0 %v64
    %v147 = vpop.f32.mrb[0].mxu0
    %v148 = vadd.f32 %v51, %v147
    %v149 = vpop.f32.mrb[0].mxu0
    %150 = vdwg.mxu0
    %v151 = vmax.f32 %v133, 0.0
    %v152 = vmax.f32 %v138, 0.0
    %v153 = vmax.f32 %v143, 0.0
    %v154 = vmax.f32 %v148, 0.0
    %v155 = vld [vmem:[%s3] sm:$0xff]
    %v156 = vld [vmem:[%s3 + $0x8] sm:$0xff]
    %v157 = vld [vmem:[%s3 + $0x10] sm:$0xff]
    %v158 = vld [vmem:[%s3 + $0x18] sm:$0xff]
    %159 = vset.pattern.permute.xlu0 1
    %160 = vperm.xlu0 %159, %v29
    %v161 = vpop.permute.xlu0 %160
    %163 = vset.pattern.permute.xlu0 1
    %164 = vperm.xlu0 %163, %v30
    %v165 = vpop.permute.xlu0 %164
    %167 = vset.pattern.permute.xlu0 1
    %168 = vperm.xlu0 %167, %v31
    %v169 = vpop.permute.xlu0 %168
    %171 = vset.pattern.permute.xlu0 1
    %172 = vperm.xlu0 %171, %v32
    %v173 = vpop.permute.xlu0 %172
    %vm175 = vcmask 261120
    %v177 = vsel %vm175, %v155, 0
    %v180 = vsel %vm175, %v156, 0
    %v183 = vsel %vm175, %v157, 0
    %v186 = vsel %vm175, %v158, 0
    %188 = vmatprep.subr.mxu0 0.0
    %189 = vmatpush1.msra.mxu0 %v151
    %190 = vmatprep.subr.mxu0 0.0
    %191 = vmatpush1.msra.mxu0 %v152
    %192 = vmatprep.subr.mxu0 0.0
    %193 = vmatpush1.msra.mxu0 %v153
    %194 = vmatprep.subr.mxu0 0.0
    %195 = vmatpush1.msra.mxu0 %v154
    %196 = vmatprep.subr.mxu0 0.0
    %197 = vmatpush1.msra.mxu0 0.0
    %198 = vmatprep.subr.mxu0 0.0
    %199 = vmatpush1.msra.mxu0 0.0
    %200 = vmatprep.subr.mxu0 0.0
    %201 = vmatpush1.msra.mxu0 0.0
    %202 = vmatprep.subr.mxu0 0.0
    %203 = vmatpush1.msra.mxu0 0.0
    %204 = vmatprep.subr.mxu0 0.0
    %205 = vmatpush1.msra.mxu0 0.0
    %206 = vmatprep.subr.mxu0 0.0
    %207 = vmatpush1.msra.mxu0 0.0
    %208 = vmatprep.subr.mxu0 0.0
    %209 = vmatpush1.msra.mxu0 0.0
    %210 = vmatprep.subr.mxu0 0.0
    %211 = vmatpush1.msra.mxu0 0.0
    %212 = vmatprep.subr.mxu0 0.0
    %213 = vmatpush1.msra.mxu0 0.0
    %214 = vmatprep.subr.mxu0 0.0
    %215 = vmatpush1.msra.mxu0 0.0
    %216 = vmatprep.subr.mxu0 0.0
    %217 = vmatpush1.msra.mxu0 0.0
    %218 = vmatprep.subr.mxu0 0.0
    %219 = vmatpush1.msra.mxu0 0.0
    %220 = vmatprep.subr.mxu0 0.0
    %221 = vmatpush1.msra.mxu0 0.0
    %222 = vmatprep.subr.mxu0 0.0
    %223 = vmatpush1.msra.mxu0 0.0
    %224 = vmatprep.subr.mxu0 0.0
    %225 = vmatpush1.msra.mxu0 0.0
    %226 = vmatprep.subr.mxu0 0.0
    %227 = vmatpush1.msra.mxu0 0.0
    %228 = vmatprep.subr.mxu0 0.0
    %229 = vmatpush1.msra.mxu0 0.0
    %230 = vmatprep.subr.mxu0 0.0
    %231 = vmatpush1.msra.mxu0 0.0
    %232 = vmatprep.subr.mxu0 0.0
    %233 = vmatpush1.msra.mxu0 0.0
    %234 = vmatprep.subr.mxu0 0.0
    %235 = vmatpush1.msra.mxu0 0.0
    %236 = vmatprep.subr.mxu0 0.0
    %237 = vmatpush1.msra.mxu0 0.0
    %238 = vmatprep.subr.mxu0 0.0
    %239 = vmatpush1.msra.mxu0 0.0
    %240 = vmatprep.subr.mxu0 0.0
    %241 = vmatpush1.msra.mxu0 0.0
    %242 = vmatprep.subr.mxu0 0.0
    %243 = vmatpush1.msra.mxu0 0.0
    %244 = vmatprep.subr.mxu0 0.0
    %245 = vmatpush1.msra.mxu0 0.0
    %246 = vmatprep.subr.mxu0 0.0
    %247 = vmatpush1.msra.mxu0 0.0
    %248 = vmatprep.subr.mxu0 0.0
    %249 = vmatpush1.msra.mxu0 0.0
    %250 = vmatprep.subr.mxu0 0.0
    %251 = vmatpush1.msra.mxu0 0.0
    %252 = vmatprep.mubr.f32.mxu0 0.0
    %253 = vmatmul.mubr.f32.gmra.mrb[0].mxu0 %v177
    %v254 = vpop.f32.mrb[0].mxu0
    %v255 = vadd.f32 %v161, %v254
    %v256 = vpop.f32.mrb[0].mxu0
    %257 = vmatprep.mubr.f32.mxu0 0.0
    %258 = vmatmul.mubr.f32.gmra.mrb[0].mxu0 %v180
    %v259 = vpop.f32.mrb[0].mxu0
    %v260 = vadd.f32 %v165, %v259
    %v261 = vpop.f32.mrb[0].mxu0
    %262 = vmatprep.mubr.f32.mxu0 0.0
    %263 = vmatmul.mubr.f32.gmra.mrb[0].mxu0 %v183
    %v264 = vpop.f32.mrb[0].mxu0
    %v265 = vadd.f32 %v169, %v264
    %v266 = vpop.f32.mrb[0].mxu0
    %267 = vmatprep.mubr.f32.mxu0 0.0
    %268 = vmatmul.mubr.f32.gmra.mrb[0].mxu0 %v186
    %v269 = vpop.f32.mrb[0].mxu0
    %v270 = vadd.f32 %v173, %v269
    %v271 = vpop.f32.mrb[0].mxu0
    %272 = vdwg.mxu0
    %v273 = vmax.f32 %v255, 0.0
    %v274 = vmax.f32 %v260, 0.0
    %v275 = vmax.f32 %v265, 0.0
    %v276 = vmax.f32 %v270, 0.0
    %v277 = vld [vmem:[%s4] sm:$0xf]
    %v278 = vld [vmem:[%s5] sm:$0xf]
    %280 = vset.pattern.permute.xlu0 2
    %281 = vperm.xlu0 %280, %v278
    %v282 = vpop.permute.xlu0 %281
    %v285 = vsel %vm175, %v277, 0
    %287 = vmatprep.subr.mxu0 0.0
    %288 = vmatpush1.msra.mxu0 %v273
    %289 = vmatprep.subr.mxu0 0.0
    %290 = vmatpush1.msra.mxu0 %v274
    %291 = vmatprep.subr.mxu0 0.0
    %292 = vmatpush1.msra.mxu0 %v275
    %293 = vmatprep.subr.mxu0 0.0
    %294 = vmatpush1.msra.mxu0 %v276
    %295 = vmatprep.subr.mxu0 0.0
    %296 = vmatpush1.msra.mxu0 0.0
    %297 = vmatprep.subr.mxu0 0.0
    %298 = vmatpush1.msra.mxu0 0.0
    %299 = vmatprep.subr.mxu0 0.0
    %300 = vmatpush1.msra.mxu0 0.0
    %301 = vmatprep.subr.mxu0 0.0
    %302 = vmatpush1.msra.mxu0 0.0
    %303 = vmatprep.subr.mxu0 0.0
    %304 = vmatpush1.msra.mxu0 0.0
    %305 = vmatprep.subr.mxu0 0.0
    %306 = vmatpush1.msra.mxu0 0.0
    %307 = vmatprep.subr.mxu0 0.0
    %308 = vmatpush1.msra.mxu0 0.0
    %309 = vmatprep.subr.mxu0 0.0
    %310 = vmatpush1.msra.mxu0 0.0
    %311 = vmatprep.subr.mxu0 0.0
    %312 = vmatpush1.msra.mxu0 0.0
    %313 = vmatprep.subr.mxu0 0.0
    %314 = vmatpush1.msra.mxu0 0.0
    %315 = vmatprep.subr.mxu0 0.0
    %316 = vmatpush1.msra.mxu0 0.0
    %317 = vmatprep.subr.mxu0 0.0
    %318 = vmatpush1.msra.mxu0 0.0
    %319 = vmatprep.subr.mxu0 0.0
    %320 = vmatpush1.msra.mxu0 0.0
    %321 = vmatprep.subr.mxu0 0.0
    %322 = vmatpush1.msra.mxu0 0.0
    %323 = vmatprep.subr.mxu0 0.0
    %324 = vmatpush1.msra.mxu0 0.0
    %325 = vmatprep.subr.mxu0 0.0
    %326 = vmatpush1.msra.mxu0 0.0
    %327 = vmatprep.subr.mxu0 0.0
    %328 = vmatpush1.msra.mxu0 0.0
    %329 = vmatprep.subr.mxu0 0.0
    %330 = vmatpush1.msra.mxu0 0.0
    %331 = vmatprep.subr.mxu0 0.0
    %332 = vmatpush1.msra.mxu0 0.0
    %333 = vmatprep.subr.mxu0 0.0
    %334 = vmatpush1.msra.mxu0 0.0
    %335 = vmatprep.subr.mxu0 0.0
    %336 = vmatpush1.msra.mxu0 0.0
    %337 = vmatprep.subr.mxu0 0.0
    %338 = vmatpush1.msra.mxu0 0.0
    %339 = vmatprep.subr.mxu0 0.0
    %340 = vmatpush1.msra.mxu0 0.0
    %341 = vmatprep.subr.mxu0 0.0
    %342 = vmatpush1.msra.mxu0 0.0
    %343 = vmatprep.subr.mxu0 0.0
    %344 = vmatpush1.msra.mxu0 0.0
    %345 = vmatprep.subr.mxu0 0.0
    %346 = vmatpush1.msra.mxu0 0.0
    %347 = vmatprep.subr.mxu0 0.0
    %348 = vmatpush1.msra.mxu0 0.0
    %349 = vmatprep.subr.mxu0 0.0
    %350 = vmatpush1.msra.mxu0 0.0
    %351 = vmatprep.mubr.f32.mxu0 0.0
    %352 = vmatmul.mubr.f32.gmra.mrb[0].mxu0 %v285
    %v353 = vpop.f32.mrb[0].mxu0
    %v354 = vadd.f32 %v282, %v353
    %v355 = vpop.f32.mrb[0].mxu0
    %356 = vdwg.mxu0
    %v357 = vld [vmem:[%s1] sm:$0x1]
    %v359 = vlaneseq
    %v360 = vshrl.u32 %v359, 7
    %v361 = vsub.s32 0, %v360
    %v362 = vrot.slane %v357, %v361
    %v364 = vmul.f32 %v354, %v362
    %365 = vst [vmem:[#allocation2] sm:$0xf] %v364
    // Predicated region
    $region26: #{tpu_custom_call.1} parent=1 // pred_check
      _
    $region27: #{tpu_custom_call.1} parent=1 // pred_check_branch
      %367 = sbr.rel (0) target = $region29
    $region28: #{tpu_custom_call.1} parent=1 // pred_region
      %s369 = ssub.s32 64, 64
      %370 = vsyncadd [#allocation3], %s369
      %s372 = sshll.u32 [#allocation2], 4
      %s373 = int_to_ptr.vmem [resolvable:$true] %s372
      %375 = dma.vmem_to_hbm [thread:$0]  %s373, 64, %s6, [#allocation3]
    $region29: #{tpu_custom_call.1} parent=1 // pred_fallthru
      _
    // Predicated region
    $region30: #{tpu_custom_call.1} parent=1 // pred_check
      _
    $region31: #{tpu_custom_call.1} parent=1 // pred_check_branch
      %377 = sbr.rel (0) target = $region33
    $region32: #{tpu_custom_call.1} parent=1 // pred_region
      %378 = dma.done [#allocation3], 64
    $region33: #{tpu_custom_call.1} parent=1 // pred_fallthru
      _
    %379 = vsyncpa [#allocation3], 1

</llo_original>
